<compile_context>
chip_gen: v7x
topology: tpu7x:2x2x1
jax: 0.10.0
libtpu: 0.0.40
codegen_flags: <defaults>
</compile_context>

<pallas_src>
import jax
import jax.numpy as jnp
from jax.experimental import pallas as pl
from jax.experimental.pallas import tpu as pltpu


def _round_up(x, m):
    return (x + m - 1) // m * m


# --------------------- message kernel (runs once per layer) -------------------
def _message_kernel(h_ref, w_ref, hw_ref):
    # HW block r = h @ W[r]   (MXU, f32 accumulate, bf16 store)
    hw_ref[...] = jnp.dot(h_ref[...], w_ref[0],
                          preferred_element_type=jnp.float32).astype(hw_ref.dtype)


def rgcn_messages(h_pad, w_pad, *, s_pad):
    """h_pad: (s_pad, in_pad) bf16, w_pad: (R, in_pad, out_pad) bf16
       -> HW: (R*s_pad, out_pad) bf16, HW[r*s_pad + s] = (h @ W[r])[s]."""
    num_rels, in_pad, out_pad = w_pad.shape
    return pl.pallas_call(
        _message_kernel,
        out_shape=jax.ShapeDtypeStruct((num_rels * s_pad, out_pad), jnp.bfloat16),
        grid_spec=pltpu.PrefetchScalarGridSpec(
            num_scalar_prefetch=0,
            grid=(num_rels,),
            in_specs=[
                pl.BlockSpec((s_pad, in_pad), lambda r: (0, 0)),          # h resident
                pl.BlockSpec((1, in_pad, out_pad), lambda r: (r, 0, 0)),  # W[r]
            ],
            out_specs=pl.BlockSpec((s_pad, out_pad), lambda r: (r, 0)),
        ),
        compiler_params=pltpu.CompilerParams(
            dimension_semantics=("parallel",)),
    )(h_pad, w_pad)


# ------------------- aggregation (+ optional fused fc/sigmoid) ----------------
def _make_agg_kernel(fuse_fc):
    if fuse_fc:
        def kernel(adj_ref, hw_ref, invdeg_ref, fcw_ref, fcb_ref, out_ref, acc_ref):
            k = pl.program_id(1)

            @pl.when(k == 0)
            def _init():
                acc_ref[...] = jnp.zeros_like(acc_ref)

            acc_ref[...] += jnp.dot(adj_ref[...], hw_ref[...],
                                    preferred_element_type=jnp.float32)

            @pl.when(k == pl.num_programs(1) - 1)
            def _finalize():
                # mean over incoming edges (inv_deg==0 for isolated dst nodes)
                h_agg = (acc_ref[...] * invdeg_ref[...]).astype(fcw_ref.dtype)
                logits = jnp.dot(h_agg, fcw_ref[...],
                                 preferred_element_type=jnp.float32)
                out_ref[...] = jax.nn.sigmoid(logits + fcb_ref[...])
    else:
        def kernel(adj_ref, hw_ref, invdeg_ref, out_ref, acc_ref):
            k = pl.program_id(1)

            @pl.when(k == 0)
            def _init():
                acc_ref[...] = jnp.zeros_like(acc_ref)

            acc_ref[...] += jnp.dot(adj_ref[...], hw_ref[...],
                                    preferred_element_type=jnp.float32)

            @pl.when(k == pl.num_programs(1) - 1)
            def _finalize():
                out_ref[...] = (acc_ref[...] * invdeg_ref[...]).astype(out_ref.dtype)
    return kernel


def _agg_vmem_limit(tile_d, tile_k, out_pad, types_pad, fuse_fc):
    bf16, f32 = 2, 4
    b = 2 * tile_d * tile_k * bf16          # adj tiles (double-buffered)
    b += 2 * tile_k * out_pad * bf16        # HW tiles (double-buffered)
    b += 2 * tile_d * f32                   # inv_deg tiles
    b += tile_d * out_pad * f32             # f32 accumulator scratch
    if fuse_fc:
        b += 2 * out_pad * types_pad * bf16   # fc weight (constant-index resident)
        b += 2 * types_pad * f32              # fc bias
        b += 2 * tile_d * types_pad * f32     # output tiles
    else:
        b += 2 * tile_d * out_pad * bf16      # output tiles
    # generous headroom, but never above the v7x-safe 64 MiB
    return int(min(64 * 1024 * 1024, max(32 * 1024 * 1024, 2 * b)))


def rgcn_aggregate(adj, hw, inv_deg, *, tile_d, tile_k, fc_w=None, fc_b=None):
    """adj: (d_pad, R*s_pad) bf16, hw: (R*s_pad, out_pad) bf16,
       inv_deg: (d_pad, 1) f32.  If fc_w/fc_b given, fuse fc + sigmoid."""
    d_pad, K = adj.shape
    out_pad = hw.shape[1]
    fuse_fc = fc_w is not None
    grid = (d_pad // tile_d, K // tile_k)

    in_specs = [
        pl.BlockSpec((tile_d, tile_k), lambda d, k: (d, k)),      # adj K-chunk
        pl.BlockSpec((tile_k, out_pad), lambda d, k: (k, 0)),     # HW K-chunk
        pl.BlockSpec((tile_d, 1), lambda d, k: (d, 0)),           # 1/deg
    ]
    args = [adj, hw, inv_deg]
    if fuse_fc:
        types_pad = fc_w.shape[1]
        in_specs += [
            pl.BlockSpec((out_pad, types_pad), lambda d, k: (0, 0)),  # fc_w resident
            pl.BlockSpec((1, types_pad), lambda d, k: (0, 0)),        # fc_b resident
        ]
        args += [fc_w, fc_b]
        out_shape = jax.ShapeDtypeStruct((d_pad, types_pad), jnp.float32)
        out_specs = pl.BlockSpec((tile_d, types_pad), lambda d, k: (d, 0))
    else:
        types_pad = out_pad
        out_shape = jax.ShapeDtypeStruct((d_pad, out_pad), jnp.bfloat16)
        out_specs = pl.BlockSpec((tile_d, out_pad), lambda d, k: (d, 0))

    return pl.pallas_call(
        _make_agg_kernel(fuse_fc),
        out_shape=out_shape,
        grid_spec=pltpu.PrefetchScalarGridSpec(
            num_scalar_prefetch=0,
            grid=grid,
            in_specs=in_specs,
            out_specs=out_specs,
            scratch_shapes=[pltpu.VMEM((tile_d, out_pad), jnp.float32)],
        ),
        compiler_params=pltpu.CompilerParams(
            dimension_semantics=("parallel", "arbitrary"),
            vmem_limit_bytes=_agg_vmem_limit(tile_d, tile_k, out_pad,
                                             types_pad, fuse_fc),
        ),
    )(*args)


# ------------------------------- glue (plain JAX) -----------------------------
def densify_block(edge_src, edge_dst, etype, num_rels, d_pad, s_pad):
    """DGL-style edge list -> packed lane-dense adjacency (d_pad, R*s_pad)
       (edge multiplicity counts) + precomputed 1/in_degree."""
    counts = jnp.zeros((d_pad, num_rels * s_pad), jnp.float32)
    counts = counts.at[edge_dst, etype * s_pad + edge_src].add(1.0)
    # bf16 holds integer counts exactly only up to 256 parallel edges per slot
    assert float(jnp.max(counts)) <= 256.0, "edge multiplicity too large for bf16 adjacency"
    deg = counts.sum(axis=1, keepdims=True)
    inv_deg = jnp.where(deg > 0.0, 1.0 / jnp.maximum(deg, 1.0), 0.0)
    return counts.astype(jnp.bfloat16), inv_deg.astype(jnp.float32)


def rgcn_forward(params, blocks):
    # h = index_select(entity, 0, blocks[0].srcdata['id'])  (plain-JAX gather)
    h = params["entity"][blocks[0]["src_ids"]]
    n_layers = len(params["layers"])
    out = None
    for li, (layer, block) in enumerate(zip(params["layers"], blocks)):
        s_pad, in_pad = layer["s_pad"], layer["in_pad"]
        h_pad = jnp.zeros((s_pad, in_pad), jnp.float32)
        h_pad = h_pad.at[:h.shape[0], :h.shape[1]].set(h.astype(jnp.float32))
        hw = rgcn_messages(h_pad.astype(jnp.bfloat16), layer["weight"], s_pad=s_pad)
        if li == n_layers - 1:
            # last layer: fuse mean + fc + sigmoid epilogue into the aggregation
            out = rgcn_aggregate(block["adj"], hw, block["inv_deg"],
                                 tile_d=block["tile_d"], tile_k=block["tile_k"],
                                 fc_w=params["fc_w"], fc_b=params["fc_b"])
        else:
            # intermediate layer: plain aggregation (self_loop=False, activation='none')
            h = rgcn_aggregate(block["adj"], hw, block["inv_deg"],
                               tile_d=block["tile_d"], tile_k=block["tile_k"])
    return out


# ------------------------------------ main ------------------------------------
if __name__ == "__main__":
    key = jax.random.PRNGKey(0)
    k_ent, k_w, k_fcw, k_fcb, k_es, k_ed, k_et = jax.random.split(key, 7)

    embedding_dim = 32
    num_nodes = 64
    num_rels = 4            # layer uses 2 * num_rels relation weights
    num_types = 16
    num_layers = 1

    num_src = 24
    num_dst = 40
    num_edges = 96
    total_rels = 2 * num_rels

    # ---- padded / lane-dense geometry ----
    in_pad = _round_up(embedding_dim, 128)
    out_pad_dim = _round_up(embedding_dim, 128)
    types_pad = _round_up(num_types, 128)
    s_pad = _round_up(num_src, 16)              # bf16 sublane pack
    while (total_rels * s_pad) % 128:           # make K = R*s_pad lane-dense
        s_pad += 16
    K = total_rels * s_pad                      # = 256 here
    d_pad = _round_up(num_dst, 16)
    # Toy tiles (>=2 dst tiles for megacore, >=2 K steps to exercise the
    # accumulator).  Production: tile_d 512-1024 on v5e/v6e, ~half on v7x;
    # tile_k up to 512.
    tile_d = 16
    tile_k = 128

    # ---- deterministic synthetic parameters (module __init__ shapes) ----
    entity = jax.random.uniform(
        k_ent, (num_nodes, embedding_dim), jnp.float32,
        minval=-10.0 / embedding_dim, maxval=10.0 / embedding_dim)

    layers = []
    for _ in range(num_layers):
        w = jax.random.normal(k_w, (total_rels, embedding_dim, embedding_dim),
                              jnp.float32)
        w_pad = jnp.zeros((total_rels, in_pad, out_pad_dim), jnp.float32)
        w_pad = w_pad.at[:, :embedding_dim, :embedding_dim].set(w)
        layers.append({"weight": w_pad.astype(jnp.bfloat16),
                       "num_rels": total_rels,
                       "s_pad": s_pad,
                       "in_pad": in_pad})

    fc_w = jax.random.normal(k_fcw, (embedding_dim, num_types),
                             jnp.float32) / jnp.sqrt(embedding_dim)
    fc_b = jax.random.normal(k_fcb, (num_types,), jnp.float32) * 0.01
    fc_w_pad = jnp.zeros((out_pad_dim, types_pad), jnp.float32)
    fc_w_pad = fc_w_pad.at[:embedding_dim, :num_types].set(fc_w)
    fc_b_pad = jnp.zeros((1, types_pad), jnp.float32)
    fc_b_pad = fc_b_pad.at[0, :num_types].set(fc_b)

    params = {
        "entity": entity,
        "layers": layers,
        "fc_w": fc_w_pad.astype(jnp.bfloat16),
        "fc_b": fc_b_pad,                      # keep bias / epilogue in f32
    }

    # ---- deterministic synthetic graph block (src frame, dst frame, typed edges) ----
    src_ids = jnp.arange(num_src, dtype=jnp.int32)   # ids into entity table
    edge_src = jax.random.randint(k_es, (num_edges,), 0, num_src, jnp.int32)
    edge_dst = jax.random.randint(k_ed, (num_edges,), 0, num_dst, jnp.int32)
    etype = jax.random.randint(k_et, (num_edges,), 0, total_rels, jnp.int32)
    adj, inv_deg = densify_block(edge_src, edge_dst, etype, total_rels, d_pad, s_pad)
    blocks = [{"src_ids": src_ids, "adj": adj, "inv_deg": inv_deg,
               "tile_d": tile_d, "tile_k": tile_k}]

    out_full = rgcn_forward(params, blocks)          # (d_pad, types_pad) f32
    out_full = jax.block_until_ready(out_full)
    out = out_full[:num_dst, :num_types]             # strip lane/sublane padding
    assert out.shape == (num_dst, num_types)
    assert bool(jnp.all((out >= 0.0) & (out <= 1.0)))

    # ---- pure-JAX reference (same bf16 casts as the kernel path) ----
    hi = jax.lax.Precision.HIGHEST
    h0 = entity[src_ids]
    h_pad_ref = jnp.zeros((s_pad, in_pad), jnp.float32)
    h_pad_ref = h_pad_ref.at[:num_src, :embedding_dim].set(h0)
    h_bf = h_pad_ref.astype(jnp.bfloat16).astype(jnp.float32)
    w_f = layers[0]["weight"].astype(jnp.float32)
    hw_ref = jnp.einsum("si,rio->rso", h_bf, w_f, precision=hi)
    hw_ref = hw_ref.reshape(total_rels * s_pad, out_pad_dim)
    hw_ref = hw_ref.astype(jnp.bfloat16).astype(jnp.float32)
    agg_ref = jnp.dot(adj.astype(jnp.float32), hw_ref, precision=hi)
    h_agg_ref = (agg_ref * inv_deg).astype(jnp.bfloat16).astype(jnp.float32)
    logits_ref = jnp.dot(h_agg_ref, params["fc_w"].astype(jnp.float32),
                         precision=hi) + fc_b_pad
    ref = jax.nn.sigmoid(logits_ref)[:num_dst, :num_types]
    assert bool(jnp.allclose(out, ref, atol=2e-2, rtol=0.0))

    print("KERNEL_OK")
</pallas_src>

<mosaic_0001>
module attributes {stable_mosaic.version = 11 : i64} {
  func.func @_message_kernel(%arg0: i32, %arg1: memref<32x128xbf16, #tpu.memory_space<vmem>>, %arg2: memref<1x128x128xbf16, #tpu.memory_space<vmem>>, %arg3: memref<32x128xbf16, #tpu.memory_space<vmem>>) attributes {dimension_semantics = [#tpu.dimension_semantics<parallel>], iteration_bounds = array<i64: 8>, scalar_prefetch = 0 : i64, scratch_operands = 0 : i64, tpu.core_type = #tpu.core_type<tc>, window_params = [{pipeline_mode = #tpu.pipeline_mode<synchronous>, transform_indices = @transform_0, window_bounds = array<i64: 32, 128>}, {transform_indices = @transform_1, window_bounds = array<i64: 1, 128, 128>}, {transform_indices = @transform_2, window_bounds = array<i64: 32, 128>}]} {
    %c0 = arith.constant 0 : index
    %c0_0 = arith.constant 0 : index
    %0 = vector.load %arg1[%c0, %c0_0] : memref<32x128xbf16, #tpu.memory_space<vmem>>, vector<32x128xbf16>
    %c0_1 = arith.constant 0 : index
    %c0_2 = arith.constant 0 : index
    %c0_3 = arith.constant 0 : index
    %1 = vector.load %arg2[%c0_1, %c0_2, %c0_3] : memref<1x128x128xbf16, #tpu.memory_space<vmem>>, vector<1x128x128xbf16>
    %2 = vector.shape_cast %1 : vector<1x128x128xbf16> to vector<128x128xbf16>
    %cst = arith.constant dense<0.000000e+00> : vector<32x128xf32>
    %3 = tpu.matmul %0, %2, %cst {dimension_numbers = #tpu.dot_dimension_numbers<[1], [0], [0], [1], [0, 0, 1, 1], [], []>} : vector<32x128xbf16>, vector<128x128xbf16>, vector<32x128xf32> -> vector<32x128xf32>
    %4 = arith.truncf %3 : vector<32x128xf32> to vector<32x128xbf16>
    %c0_4 = arith.constant 0 : index
    %c0_5 = arith.constant 0 : index
    %5 = vector.load %arg3[%c0_4, %c0_5] : memref<32x128xbf16, #tpu.memory_space<vmem>>, vector<32x128xbf16>
    tpu.vector_store %arg3[%c0_4, %c0_5], %4 {strides = array<i32>} : memref<32x128xbf16, #tpu.memory_space<vmem>>, vector<32x128xbf16>,
    return
  }
  func.func @transform_0(%arg0: i32) -> (i32, i32) {
    %c0_i32 = arith.constant 0 : i32
    %c0_i32_0 = arith.constant 0 : i32
    %c0_i32_1 = arith.constant 0 : i32
    return %c0_i32, %c0_i32_0 : i32, i32
  }
  func.func @transform_1(%arg0: i32) -> (i32, i32, i32) {
    %c0_i32 = arith.constant 0 : i32
    %c0_i32_0 = arith.constant 0 : i32
    %c0_i32_1 = arith.constant 0 : i32
    return %arg0, %c0_i32, %c0_i32_0 : i32, i32, i32
  }
  func.func @transform_2(%arg0: i32) -> (i32, i32) {
    %c0_i32 = arith.constant 0 : i32
    %c0_i32_0 = arith.constant 0 : i32
    return %arg0, %c0_i32 : i32, i32
  }
}

</mosaic_0001>

<llo_original>
// kernel: tpu_custom_call.1
$region0: #{tpu_custom_call.1}
  #allocation0 [shape = 'u32[]', space=smem, size = 0x4, offset = 0x4, fixed_abs, tag = 'smem constant byte address 0x4 - core index']
  #allocation1 [shape = 'u32[144,128]{1,0:T(1,128)}', space=vmem, size = 0x12000, scoped, tag = 'internal scratch']
  %s0 = inlined_call_operand.hbm [shape: bf16[32,128], index: 0, kind: input, shape index: {}]
  %s1 = inlined_call_operand.hbm [shape: bf16[8,128,128], index: 1, kind: input, shape index: {}]
  %s2 = inlined_call_operand.hbm [shape: bf16[256,128], index: 2, kind: output, shape index: {}]
  %s3 = sld [smem:[#allocation0]]
  $region49: #{tpu_custom_call.1} parent=0
    _
  %s5 = ssub.s32 1, %s3
  %s6 = scalar_select 0, %s5, %s3
  $region1: #{tpu_custom_call.1} parent=0
    #allocation2 [shape = 'u8[8192]{0}', space=vmem, size = 0x2000, scoped, tag = 'input window, operand 0, single buffered']
    #allocation3 [shape = 's32[2]{0}', space=sflag, size = 0x8, scoped, tag = 'scoped memory for tpu_custom_call.1']
    #allocation4 [shape = 's32[2]{0}', space=sflag, size = 0x8, scoped, tag = 'scoped memory for tpu_custom_call.1']
    #allocation5 [shape = 'u8[65536]{0}', space=vmem, size = 0x10000, scoped, tag = 'input window, operand 1']
    #allocation6 [shape = 's32[2]{0}', space=sflag, size = 0x8, scoped, tag = 'scoped memory for tpu_custom_call.1']
    #allocation7 [shape = 'u8[16384]{0}', space=vmem, size = 0x4000, scoped, tag = 'output window, operand 0']
    %7 = vsyncpa [#allocation3], 0
    %8 = vsyncpa [#allocation6], 0
    %s9 = scalar_lea.sflag [#allocation6], 1
    %10 = vsyncpa %s9, 0
    %11 = vsyncpa [#allocation4], 0
    %s12 = scalar_lea.sflag [#allocation4], 1
    %13 = vsyncpa %s12, 0
    loop: start=0, step=1, limit=10
    $region2: #{tpu_custom_call.1} parent=1 // loop_pre_header
      _
    $region3: #{tpu_custom_call.1} parent=1 // loop_header
      %s15 = sphi 0, %s19
      %p16 = scmp.ge.s32.totalorder %s15, 10
      %s23 = sphi 0, %s23
      %s25 = sphi 0, %s23
      %s26 = sphi 0, %s25
      %s40 = sphi 0, %s26
      %s46 = sphi 0, %s48
      %s49 = sphi 0, %s46
      %s50 = sphi 0, %s49
      %s66 = sphi 0, %s50
      %s72 = sphi 0, %s74
      %s75 = sphi 0, %s72
      %s76 = sphi 0, %s75
      %s92 = sphi 0, %s76
    $region4: #{tpu_custom_call.1} parent=1 // loop_header_branch
      %18 = sbr.rel (%p16) target = $region8
    $region5: #{tpu_custom_call.1} parent=1 // loop_body
      %s20 = ssub.s32 %s15, 1
      %s21 = ssub.s32 %s15, 2
      %s22 = sadd.s32 %s15, 1
      %s24 = sadd.s32 %s23, 1
      %p27 = scmp.eq.s32.totalorder %s15, 7
      %p28 = scmp.ne.s32.totalorder %s23, %s25
      %p29 = scmp.eq.s32.totalorder %s15, 0
      %p30 = por %p28, %p29
      %p31 = scmp.ne.s32.totalorder %s23, %s25
      %p32 = scmp.eq.s32.totalorder %s20, 7
      %p33 = por %p31, %p32
      %p34 = scmp.ne.s32.totalorder %s25, %s26
      %p35 = scmp.eq.s32.totalorder %s20, 0
      %p36 = por %p34, %p35
      %p37 = scmp.ne.s32.totalorder %s25, %s26
      %p38 = scmp.eq.s32.totalorder %s21, 7
      %p39 = por %p37, %p38
      %p41 = scmp.ne.s32.totalorder %s26, %s40
      %p42 = scmp.eq.s32.totalorder %s21, 0
      %p43 = por %p41, %p42
      %s44 = ssub.s32 %s15, %s22
      %p45 = scmp.eq.s32.totalorder %s44, 0
      %s47 = sadd.s32 %s46, 1
      %s48 = scalar_select %p45, %s46, %s47
      %p51 = pneg %p45
      %p52 = scmp.eq.s32.totalorder %s15, 7
      %p53 = por %p51, %p52
      %p54 = scmp.ne.s32.totalorder %s46, %s49
      %p55 = scmp.eq.s32.totalorder %s15, 0
      %p56 = por %p54, %p55
      %p57 = scmp.ne.s32.totalorder %s46, %s49
      %p58 = scmp.eq.s32.totalorder %s20, 7
      %p59 = por %p57, %p58
      %p60 = scmp.ne.s32.totalorder %s49, %s50
      %p61 = scmp.eq.s32.totalorder %s20, 0
      %p62 = por %p60, %p61
      %p63 = scmp.ne.s32.totalorder %s49, %s50
      %p64 = scmp.eq.s32.totalorder %s21, 7
      %p65 = por %p63, %p64
      %p67 = scmp.ne.s32.totalorder %s50, %s66
      %p68 = scmp.eq.s32.totalorder %s21, 0
      %p69 = por %p67, %p68
      %s70 = ssub.s32 %s15, %s22
      %p71 = scmp.eq.s32.totalorder %s70, 0
      %s73 = sadd.s32 %s72, 1
      %s74 = scalar_select %p71, %s72, %s73
      %p77 = pneg %p71
      %p78 = scmp.eq.s32.totalorder %s15, 7
      %p79 = por %p77, %p78
      %p80 = scmp.ne.s32.totalorder %s72, %s75
      %p81 = scmp.eq.s32.totalorder %s15, 0
      %p82 = por %p80, %p81
      %p83 = scmp.ne.s32.totalorder %s72, %s75
      %p84 = scmp.eq.s32.totalorder %s20, 7
      %p85 = por %p83, %p84
      %p86 = scmp.ne.s32.totalorder %s75, %s76
      %p87 = scmp.eq.s32.totalorder %s20, 0
      %p88 = por %p86, %p87
      %p89 = scmp.ne.s32.totalorder %s75, %s76
      %p90 = scmp.eq.s32.totalorder %s21, 7
      %p91 = por %p89, %p90
      %p93 = scmp.ne.s32.totalorder %s76, %s92
      %p94 = scmp.eq.s32.totalorder %s21, 0
      %p95 = por %p93, %p94
      %p96 = scmp.le.s32.totalorder 1, %s15
      %p97 = scmp.lt.s32.totalorder %s15, 9
      %p98 = pnand %p96, %p97
      %p99 = pneg %p98
      // Predicated region
      $region9: #{tpu_custom_call.1} parent=5 // pred_check
        _
      $region10: #{tpu_custom_call.1} parent=5 // pred_check_branch
        %101 = sbr.rel (%p98) target = $region12
      $region11: #{tpu_custom_call.1} parent=5 // pred_region
        %s102 = ssub.s32 %s15, 1
        // Predicated region
        $region13: #{tpu_custom_call.1} parent=11 // pred_check
          %p103 = pneg %p36
        $region14: #{tpu_custom_call.1} parent=11 // pred_check_branch
          %105 = sbr.rel (%p103) target = $region16
        $region15: #{tpu_custom_call.1} parent=11 // pred_region
          %s107 = ssub.s32 256, 256
          %108 = vsyncadd [#allocation3], %s107
          %s109 = sshll.u32 [#allocation2], 4
          %s110 = int_to_ptr.vmem [resolvable:$true] %s109
          %115 = dma.hbm_to_vmem [thread:$0]  %s0, 256, %s110, [#allocation3], 64, 64, 4
        $region16: #{tpu_custom_call.1} parent=11 // pred_fallthru
          _
      $region12: #{tpu_custom_call.1} parent=5 // pred_fallthru
        _
      %p116 = scmp.lt.s32.totalorder %s15, 8
      // Predicated region
      $region17: #{tpu_custom_call.1} parent=5 // pred_check
        %p117 = pneg %p116
      $region18: #{tpu_custom_call.1} parent=5 // pred_check_branch
        %119 = sbr.rel (%p117) target = $region20
      $region19: #{tpu_custom_call.1} parent=5 // pred_region
        // Predicated region
        $region21: #{tpu_custom_call.1} parent=19 // pred_check
          %p120 = pneg %p56
        $region22: #{tpu_custom_call.1} parent=19 // pred_check_branch
          %122 = sbr.rel (%p120) target = $region24
        $region23: #{tpu_custom_call.1} parent=19 // pred_region
          %s123 = sand.u32 %s46, 1
          %s124 = scalar_lea.sflag [#allocation6], %s123
          %s125 = sand.u32 %s46, 1
          %s126 = smul.addr %s125, 64
          %s127 = scalar_lea.vmem [#allocation5], %s126
          %s129 = ssub.s32 1024, 1024
          %130 = vsyncadd %s124, %s129
          %s131 = smul.addr %s15, 16
          %s132 = smul.addr %s131, 64
          %s133 = scalar_lea.hbm %s1, %s132
          %s134 = sshll.u32 %s127, 4
          %s135 = int_to_ptr.vmem [resolvable:$true] %s134
          %140 = dma.hbm_to_vmem [thread:$0]  %s133, 1024, %s135, %s124, 64, 64, 4
        $region24: #{tpu_custom_call.1} parent=19 // pred_fallthru
          _
      $region20: #{tpu_custom_call.1} parent=5 // pred_fallthru
        _
      %p141 = scmp.le.s32.totalorder 1, %s15
      %p142 = scmp.lt.s32.totalorder %s15, 9
      %p143 = pnand %p141, %p142
      %p144 = pneg %p143
      // Predicated region
      $region25: #{tpu_custom_call.1} parent=5 // pred_check
        _
      $region26: #{tpu_custom_call.1} parent=5 // pred_check_branch
        %146 = sbr.rel (%p143) target = $region28
      $region27: #{tpu_custom_call.1} parent=5 // pred_region
        %s147 = ssub.s32 %s15, 1
        // Predicated region
        $region29: #{tpu_custom_call.1} parent=27 // pred_check
          %p148 = pneg %p36
        $region30: #{tpu_custom_call.1} parent=27 // pred_check_branch
          %150 = sbr.rel (%p148) target = $region32
        $region31: #{tpu_custom_call.1} parent=27 // pred_region
          %151 = dma.done [#allocation3], 256
        $region32: #{tpu_custom_call.1} parent=27 // pred_fallthru
          _
        %s152 = sand.u32 %s49, 1
        %s153 = scalar_lea.sflag [#allocation6], %s152
        %s154 = sand.u32 %s49, 1
        %s155 = smul.addr %s154, 64
        %s156 = scalar_lea.vmem [#allocation5], %s155
        // Predicated region
        $region33: #{tpu_custom_call.1} parent=27 // pred_check
          %p157 = pneg %p62
        $region34: #{tpu_custom_call.1} parent=27 // pred_check_branch
          %159 = sbr.rel (%p157) target = $region36
        $region35: #{tpu_custom_call.1} parent=27 // pred_region
          %160 = dma.done %s153, 1024
        $region36: #{tpu_custom_call.1} parent=27 // pred_fallthru
          _
        %p161 = pneg %p36
        %p162 = pneg %p33
        %s163 = sand.u32 %s49, 1
        %s164 = scalar_lea.sflag [#allocation6], %s163
        %s165 = sand.u32 %s49, 1
        %s166 = smul.addr %s165, 64
        %s167 = scalar_lea.vmem [#allocation5], %s166
        %p168 = pneg %p62
        %p169 = pneg %p59
        %p170 = pneg %p88
        %p171 = pneg %p85
        %s172 = sand.u32 %s75, 1
        %s173 = scalar_lea.sflag [#allocation4], %s172
        %s174 = sand.u32 %s75, 1
        %s175 = smul.addr %s174, 16
        %s176 = scalar_lea.vmem [#allocation7], %s175
        %s177 = smul.u32 4, %s20
        %v179 = vld [vmem:[#allocation2] sm:$0xf]
        %v180 = vld [vmem:[#allocation2 + $0x4] sm:$0xf]
        %v181 = vld [vmem:[#allocation2 + $0x8] sm:$0xf]
        %v182 = vld [vmem:[#allocation2 + $0xc] sm:$0xf]
        %v183 = vld [vmem:[%s156] sm:$0xf]
        %v184 = vld [vmem:[%s156 + $0x4] sm:$0xf]
        %v185 = vld [vmem:[%s156 + $0x8] sm:$0xf]
        %v186 = vld [vmem:[%s156 + $0xc] sm:$0xf]
        %v187 = vld [vmem:[%s156 + $0x10] sm:$0xf]
        %v188 = vld [vmem:[%s156 + $0x14] sm:$0xf]
        %v189 = vld [vmem:[%s156 + $0x18] sm:$0xf]
        %v190 = vld [vmem:[%s156 + $0x1c] sm:$0xf]
        %v191 = vld [vmem:[%s156 + $0x20] sm:$0xf]
        %v192 = vld [vmem:[%s156 + $0x24] sm:$0xf]
        %v193 = vld [vmem:[%s156 + $0x28] sm:$0xf]
        %v194 = vld [vmem:[%s156 + $0x2c] sm:$0xf]
        %v195 = vld [vmem:[%s156 + $0x30] sm:$0xf]
        %v196 = vld [vmem:[%s156 + $0x34] sm:$0xf]
        %v197 = vld [vmem:[%s156 + $0x38] sm:$0xf]
        %v198 = vld [vmem:[%s156 + $0x3c] sm:$0xf]
        %v203 = vunpack.c.l.b16 %v179
        %v204 = vunpack.c.l.b16 %v180
        %v205 = vunpack.c.l.b16 %v181
        %v206 = vunpack.c.l.b16 %v182
        %v207 = vpack.c.b16 %v204, %v203
        %v208 = vpack.c.b16 %v206, %v205
        %v227 = vunpack.c.l.b16 %v183
        %v228 = vunpack.c.l.b16 %v184
        %v229 = vunpack.c.l.b16 %v185
        %v230 = vunpack.c.l.b16 %v186
        %v231 = vunpack.c.l.b16 %v187
        %v232 = vunpack.c.l.b16 %v188
        %v233 = vunpack.c.l.b16 %v189
        %v234 = vunpack.c.l.b16 %v190
        %v235 = vunpack.c.l.b16 %v191
        %v236 = vunpack.c.l.b16 %v192
        %v237 = vunpack.c.l.b16 %v193
        %v238 = vunpack.c.l.b16 %v194
        %v239 = vunpack.c.l.b16 %v195
        %v240 = vunpack.c.l.b16 %v196
        %v241 = vunpack.c.l.b16 %v197
        %v242 = vunpack.c.l.b16 %v198
        %v243 = vpack.c.b16 %v228, %v227
        %v244 = vpack.c.b16 %v230, %v229
        %v245 = vpack.c.b16 %v232, %v231
        %v246 = vpack.c.b16 %v234, %v233
        %v247 = vpack.c.b16 %v236, %v235
        %v248 = vpack.c.b16 %v238, %v237
        %v249 = vpack.c.b16 %v240, %v239
        %v250 = vpack.c.b16 %v242, %v241
        %259 = vmatprep.subr.bf16.mxu0 0
        %260 = vmatpush1.bf16.msra.mxu0 %v243
        %261 = vmatprep.subr.bf16.mxu0 0
        %262 = vmatpush1.bf16.msra.mxu0 %v244
        %263 = vmatprep.subr.bf16.mxu0 0
        %264 = vmatpush1.bf16.msra.mxu0 %v245
        %265 = vmatprep.subr.bf16.mxu0 0
        %266 = vmatpush1.bf16.msra.mxu0 %v246
        %267 = vmatprep.subr.bf16.mxu0 0
        %268 = vmatpush1.bf16.msra.mxu0 %v247
        %269 = vmatprep.subr.bf16.mxu0 0
        %270 = vmatpush1.bf16.msra.mxu0 %v248
        %271 = vmatprep.subr.bf16.mxu0 0
        %272 = vmatpush1.bf16.msra.mxu0 %v249
        %273 = vmatprep.subr.bf16.mxu0 0
        %274 = vmatpush1.bf16.msra.mxu0 %v250
        %275 = vmatprep.subr.bf16.mxu0 0
        %276 = vmatpush1.bf16.msra.mxu0 0
        %277 = vmatprep.subr.bf16.mxu0 0
        %278 = vmatpush1.bf16.msra.mxu0 0
        %279 = vmatprep.subr.bf16.mxu0 0
        %280 = vmatpush1.bf16.msra.mxu0 0
        %281 = vmatprep.subr.bf16.mxu0 0
        %282 = vmatpush1.bf16.msra.mxu0 0
        %283 = vmatprep.subr.bf16.mxu0 0
        %284 = vmatpush1.bf16.msra.mxu0 0
        %285 = vmatprep.subr.bf16.mxu0 0
        %286 = vmatpush1.bf16.msra.mxu0 0
        %287 = vmatprep.subr.bf16.mxu0 0
        %288 = vmatpush1.bf16.msra.mxu0 0
        %289 = vmatprep.subr.bf16.mxu0 0
        %290 = vmatpush1.bf16.msra.mxu0 0
        %291 = vmatprep.mubr.bf16.mxu0 0
        %292 = vmatmul.mubr.bf16.gmra.mrb[0].mxu0 %v207
        %v293 = vpop.f32.mrb[0].mxu0
        %v294 = vadd.f32 0.0, %v293
        %v295 = vpop.f32.mrb[0].mxu0
        %v296 = vpop.f32.mrb[0].mxu0
        %v297 = vadd.f32 0.0, %v296
        %v298 = vpop.f32.mrb[0].mxu0
        %299 = vmatprep.mubr.bf16.mxu0 0
        %300 = vmatmul.mubr.bf16.gmra.mrb[0].mxu0 %v208
        %v301 = vpop.f32.mrb[0].mxu0
        %v302 = vadd.f32 0.0, %v301
        %v303 = vpop.f32.mrb[0].mxu0
        %v304 = vpop.f32.mrb[0].mxu0
        %v305 = vadd.f32 0.0, %v304
        %v306 = vpop.f32.mrb[0].mxu0
        %307 = vdwg.mxu0
        %v308 = vpack.c.bf16 %v297, %v294
        %v309 = vpack.c.bf16 %v305, %v302
        %v312 = vunpack.c.l.b16 %v308
        %v313 = vunpack.c.h.b16 %v308
        %v314 = vunpack.c.l.b16 %v309
        %v315 = vunpack.c.h.b16 %v309
        %v316 = vpack.c.b16 %v312, %v312
        %v317 = vpack.c.b16 %v313, %v313
        %v318 = vpack.c.b16 %v314, %v314
        %v319 = vpack.c.b16 %v315, %v315
        %324 = vst [vmem:[%s176] sm:$0xf] %v316
        %325 = vst [vmem:[%s176 + $0x4] sm:$0xf] %v317
        %326 = vst [vmem:[%s176 + $0x8] sm:$0xf] %v318
        %327 = vst [vmem:[%s176 + $0xc] sm:$0xf] %v319
        %s328 = sand.u32 %s75, 1
        %s329 = scalar_lea.sflag [#allocation4], %s328
        %s330 = sand.u32 %s75, 1
        %s331 = smul.addr %s330, 16
        %s332 = scalar_lea.vmem [#allocation7], %s331
        // Predicated region
        $region37: #{tpu_custom_call.1} parent=27 // pred_check
          %p333 = pneg %p85
        $region38: #{tpu_custom_call.1} parent=27 // pred_check_branch
          %335 = sbr.rel (%p333) target = $region40
        $region39: #{tpu_custom_call.1} parent=27 // pred_region
          %s336 = smul.u32 4, %s20
          %s338 = ssub.s32 256, 256
          %339 = vsyncadd %s329, %s338
          %s340 = smul.addr %s336, 64
          %s341 = scalar_lea.hbm %s2, %s340
          %s342 = sshll.u32 %s332, 4
          %s343 = int_to_ptr.vmem [resolvable:$true] %s342
          %348 = dma.vmem_to_hbm [thread:$0]  %s343, 256, %s341, %s329, 64, 64, 4
        $region40: #{tpu_custom_call.1} parent=27 // pred_fallthru
          _
      $region28: #{tpu_custom_call.1} parent=5 // pred_fallthru
        _
      %p349 = scmp.le.s32.totalorder 2, %s15
      // Predicated region
      $region41: #{tpu_custom_call.1} parent=5 // pred_check
        %p350 = pneg %p349
      $region42: #{tpu_custom_call.1} parent=5 // pred_check_branch
        %352 = sbr.rel (%p350) target = $region44
      $region43: #{tpu_custom_call.1} parent=5 // pred_region
        %s353 = ssub.s32 %s15, 2
        // Predicated region
        $region45: #{tpu_custom_call.1} parent=43 // pred_check
          %p354 = pneg %p91
        $region46: #{tpu_custom_call.1} parent=43 // pred_check_branch
          %356 = sbr.rel (%p354) target = $region48
        $region47: #{tpu_custom_call.1} parent=43 // pred_region
          %s357 = sand.u32 %s76, 1
          %s358 = scalar_lea.sflag [#allocation4], %s357
          %s359 = sand.u32 %s76, 1
          %s360 = smul.addr %s359, 16
          %s361 = scalar_lea.vmem [#allocation7], %s360
          %362 = dma.done %s358, 256
        $region48: #{tpu_custom_call.1} parent=43 // pred_fallthru
          _
      $region44: #{tpu_custom_call.1} parent=5 // pred_fallthru
        _
    $region6: #{tpu_custom_call.1} parent=1 // loop_footer
      %s19 = sadd.s32 1, %s15
    $region7: #{tpu_custom_call.1} parent=1 // loop_footer_branch
      %14 = sbr.rel target = $region3
    $region8: #{tpu_custom_call.1} parent=1 // loop_exit
      _
    %363 = vsyncpa [#allocation3], 1
    %s364 = scalar_lea.sflag [#allocation3], 1
    %365 = vsyncpa %s364, 1
    %366 = vsyncpa [#allocation6], 1
    %s367 = scalar_lea.sflag [#allocation6], 1
    %368 = vsyncpa %s367, 1
    %369 = vsyncpa [#allocation4], 1
    %s370 = scalar_lea.sflag [#allocation4], 1
    %371 = vsyncpa %s370, 1

</llo_original>
